<compile_context>
chip_gen: v7x
topology: tpu7x:2x2x1
jax: 0.10.0
libtpu: 0.0.40
codegen_flags: <defaults>
</compile_context>

<pallas_src>
import jax
import jax.numpy as jnp
import numpy as np
from jax.experimental import pallas as pl
from jax.experimental.pallas import tpu as pltpu

K_SEGMENTS = 16            # number of linear segments in the approximation
X_MIN, X_MAX = -6.0, 6.0   # approximation range (clamped outside)
STEP = (X_MAX - X_MIN) / K_SEGMENTS
INV_STEP = 1.0 / STEP
LANES = 128
MAX_BLOCK_BYTES = 4 << 20      # 4 MiB per input block
VMEM_LIMIT_BYTES = 32 << 20    # explicit scoped-VMEM budget (safe on v5e/v6e/v7x)


def _build_apx_table():
    """Deterministic stand-in for the file-defined approximation: PWL sigmoid."""
    bp = np.linspace(X_MIN, X_MAX, K_SEGMENTS + 1).astype(np.float32)      # (K+1,)
    vals = (1.0 / (1.0 + np.exp(-bp.astype(np.float64)))).astype(np.float32)
    slopes = ((vals[1:].astype(np.float64) - vals[:-1]) /
              (bp[1:].astype(np.float64) - bp[:-1]))                        # (K,)
    # Intercepts computed in f64 then rounded once: y_k(x) = slope_k*x + c_k.
    intercepts = vals[:-1].astype(np.float64) - slopes * bp[:-1].astype(np.float64)
    return bp, slopes.astype(np.float32), intercepts.astype(np.float32), vals


_BP, _SLOPES, _INTERCEPTS, _VALS = _build_apx_table()


def _bit_select(bits, table):
    """Binary select tree over a 16-entry constant table.

    `bits` = [bit0, bit1, bit2, bit3] boolean masks of the per-element segment
    index (shared between the slope and intercept trees).  15 selects total.
    """
    cur = [jnp.float32(float(v)) for v in table]
    for b in bits:
        cur = [jnp.where(b, cur[i + 1], cur[i]) for i in range(0, len(cur), 2)]
    return cur[0]


def _apx_kernel(x_ref, o_ref):
    """Elementwise PWL table lookup on the VPU.

    x_ref/o_ref: VMEM (tile_rows, LANES) tiles in the caller's dtype.
    """
    x = x_ref[...].astype(jnp.float32)
    # Clamp into the table range: at the endpoints the segment formulas yield
    # exactly vals[0] / vals[K], i.e. jnp.interp's clamped behavior.
    xc = jnp.clip(x, X_MIN, X_MAX)
    # Uniform breakpoints -> arithmetic segment index in [0, K-1].
    idx_f = jnp.minimum((xc - X_MIN) * jnp.float32(INV_STEP),
                        jnp.float32(K_SEGMENTS - 1))
    idx = idx_f.astype(jnp.int32)
    # 4 shared bit-test masks drive both select trees (no 15 f32 compares).
    bits = [(idx & (1 << k)) != 0 for k in range(4)]
    s = _bit_select(bits, _SLOPES)
    c = _bit_select(bits, _INTERCEPTS)
    y = s * xc + c
    # NaN propagates: clip keeps NaN and s*NaN + c is NaN, so no isnan fixup.
    o_ref[...] = y.astype(o_ref.dtype)


def _pwl_jnp(x):
    """Plain-JAX PWL evaluation (ragged <128-element tail / tiny inputs)."""
    y = jnp.interp(x.astype(jnp.float32), jnp.asarray(_BP), jnp.asarray(_VALS))
    return y.astype(x.dtype)


def _round_up(a, b):
    return -(-a // b) * b


def _choose_tile_rows(rows, max_rows):
    """Pick a lane-dense row-tile: (8,128)-aligned, <=max_rows, and an even
    grid of >=2 blocks whenever there is enough work (megacore on v7x)."""
    if rows <= 8:
        return rows  # single block equal to the full array (allowed by Pallas)
    nblk = max(2, -(-rows // max_rows))
    nblk += nblk % 2                     # prefer an even block count for 2 TCs
    tile = _round_up(-(-rows // nblk), 8)
    return min(tile, max_rows)


@jax.jit
def self_define_apx(x):
    """Applies the baked PWL approximation elementwise (any shape/dtype)."""
    orig_shape = x.shape
    orig_dtype = x.dtype
    flat = x.reshape(-1)
    n = flat.shape[0]
    n_aligned = (n // LANES) * LANES

    if n_aligned == 0:
        # Fewer than 128 elements: not worth a kernel launch.
        return _pwl_jnp(flat).reshape(orig_shape)

    aligned = flat if n_aligned == n else flat[:n_aligned]
    rows = n_aligned // LANES
    x2d = aligned.reshape(rows, LANES)

    itemsize = jnp.dtype(orig_dtype).itemsize
    max_rows = max(8, MAX_BLOCK_BYTES // (LANES * itemsize))   # f32: 8192, bf16: 16384
    tile_rows = _choose_tile_rows(rows, max_rows)
    grid = (pl.cdiv(rows, tile_rows),)   # partial last block handled by masking

    out2d = pl.pallas_call(
        _apx_kernel,
        out_shape=jax.ShapeDtypeStruct((rows, LANES), orig_dtype),
        grid=grid,
        in_specs=[pl.BlockSpec((tile_rows, LANES), lambda i: (i, 0))],
        out_specs=pl.BlockSpec((tile_rows, LANES), lambda i: (i, 0)),
        compiler_params=pltpu.CompilerParams(
            dimension_semantics=("parallel",),
            vmem_limit_bytes=VMEM_LIMIT_BYTES),
    )(x2d)

    out_flat = out2d.reshape(-1)
    if n_aligned != n:
        # Ragged tail (<128 elements): plain JAX, no full-array pad/slice copies.
        out_flat = jnp.concatenate([out_flat, _pwl_jnp(flat[n_aligned:])])
    return out_flat.reshape(orig_shape)


def _reference(x):
    """Pure-JAX reference: clamped linear interpolation over the same table."""
    bp = jnp.asarray(_BP)
    vals = jnp.asarray(_VALS)
    return jnp.interp(x.astype(jnp.float32), bp, vals).astype(x.dtype)


if __name__ == "__main__":
    key = jax.random.PRNGKey(0)
    k1, k2, k3 = jax.random.split(key, 3)

    # 1) NCHW f32, lane-aligned element count (common conv-activation case).
    x = jax.random.normal(k1, (2, 4, 16, 16), dtype=jnp.float32) * 3.0
    out = jax.block_until_ready(self_define_apx(x))
    np.testing.assert_allclose(np.asarray(out), np.asarray(_reference(x)),
                               rtol=1e-5, atol=1e-5)

    # 2) Ragged element count (1155 = 9 full lane-rows + 3-element tail) ->
    #    exercises the partial-last-block and tail paths.
    xr = jax.random.normal(k2, (3, 5, 7, 11), dtype=jnp.float32) * 4.0
    outr = jax.block_until_ready(self_define_apx(xr))
    np.testing.assert_allclose(np.asarray(outr), np.asarray(_reference(xr)),
                               rtol=1e-5, atol=1e-5)

    # 3) bf16 input (I/O stays bf16; compute in f32 inside the kernel).
    xb = (jax.random.normal(k3, (2, 4, 16, 16), dtype=jnp.float32) * 3.0
          ).astype(jnp.bfloat16)
    outb = jax.block_until_ready(self_define_apx(xb))
    np.testing.assert_allclose(np.asarray(outb).astype(np.float32),
                               np.asarray(_reference(xb)).astype(np.float32),
                               rtol=2e-2, atol=2e-2)

    print("KERNEL_OK")
</pallas_src>

<mosaic_0001>
module attributes {stable_mosaic.version = 11 : i64} {
  func.func @_apx_kernel(%arg0: i32, %arg1: memref<8x128xf32, #tpu.memory_space<vmem>>, %arg2: memref<8x128xf32, #tpu.memory_space<vmem>>) attributes {dimension_semantics = [#tpu.dimension_semantics<parallel>], iteration_bounds = array<i64: 2>, scalar_prefetch = 0 : i64, scratch_operands = 0 : i64, tpu.core_type = #tpu.core_type<tc>, window_params = [{transform_indices = @transform_0, window_bounds = array<i64: 8, 128>}, {transform_indices = @transform_1, window_bounds = array<i64: 8, 128>}]} {
    %c0 = arith.constant 0 : index
    %c0_0 = arith.constant 0 : index
    %0 = vector.load %arg1[%c0, %c0_0] : memref<8x128xf32, #tpu.memory_space<vmem>>, vector<8x128xf32>
    %cst = arith.constant -6.000000e+00 : f32
    %cst_1 = arith.constant 6.000000e+00 : f32
    %1 = vector.broadcast %cst : f32 to vector<8x128xf32>
    %2 = arith.maximumf %1, %0 : vector<8x128xf32>
    %3 = vector.broadcast %cst_1 : f32 to vector<8x128xf32>
    %4 = arith.minimumf %3, %2 : vector<8x128xf32>
    %cst_2 = arith.constant -6.000000e+00 : f32
    %5 = vector.broadcast %cst_2 : f32 to vector<8x128xf32>
    %6 = arith.subf %4, %5 : vector<8x128xf32>
    %cst_3 = arith.constant 1.33333337 : f32
    %7 = vector.broadcast %cst_3 : f32 to vector<8x128xf32>
    %8 = arith.mulf %6, %7 : vector<8x128xf32>
    %cst_4 = arith.constant 1.500000e+01 : f32
    %9 = vector.broadcast %cst_4 : f32 to vector<8x128xf32>
    %10 = arith.minimumf %8, %9 : vector<8x128xf32>
    %11 = arith.fptosi %10 : vector<8x128xf32> to vector<8x128xi32>
    %c1_i32 = arith.constant 1 : i32
    %12 = vector.broadcast %c1_i32 : i32 to vector<8x128xi32>
    %13 = arith.andi %11, %12 : vector<8x128xi32>
    %c0_i32 = arith.constant 0 : i32
    %14 = vector.broadcast %c0_i32 : i32 to vector<8x128xi32>
    %15 = arith.cmpi ne, %13, %14 : vector<8x128xi32>
    %c2_i32 = arith.constant 2 : i32
    %16 = vector.broadcast %c2_i32 : i32 to vector<8x128xi32>
    %17 = arith.andi %11, %16 : vector<8x128xi32>
    %c0_i32_5 = arith.constant 0 : i32
    %18 = vector.broadcast %c0_i32_5 : i32 to vector<8x128xi32>
    %19 = arith.cmpi ne, %17, %18 : vector<8x128xi32>
    %c4_i32 = arith.constant 4 : i32
    %20 = vector.broadcast %c4_i32 : i32 to vector<8x128xi32>
    %21 = arith.andi %11, %20 : vector<8x128xi32>
    %c0_i32_6 = arith.constant 0 : i32
    %22 = vector.broadcast %c0_i32_6 : i32 to vector<8x128xi32>
    %23 = arith.cmpi ne, %21, %22 : vector<8x128xi32>
    %c8_i32 = arith.constant 8 : i32
    %24 = vector.broadcast %c8_i32 : i32 to vector<8x128xi32>
    %25 = arith.andi %11, %24 : vector<8x128xi32>
    %c0_i32_7 = arith.constant 0 : i32
    %26 = vector.broadcast %c0_i32_7 : i32 to vector<8x128xi32>
    %27 = arith.cmpi ne, %25, %26 : vector<8x128xi32>
    %cst_8 = arith.constant 0.00768908905 : f32
    %cst_9 = arith.constant 0.00366333686 : f32
    %28 = vector.broadcast %cst_8 : f32 to vector<8x128xf32>
    %29 = vector.broadcast %cst_9 : f32 to vector<8x128xf32>
    %30 = arith.select %15, %28, %29 : vector<8x128xi1>, vector<8x128xf32>
    %cst_10 = arith.constant 0.0325980037 : f32
    %cst_11 = arith.constant 0.0159872379 : f32
    %31 = vector.broadcast %cst_10 : f32 to vector<8x128xf32>
    %32 = vector.broadcast %cst_11 : f32 to vector<8x128xf32>
    %33 = arith.select %15, %31, %32 : vector<8x128xi1>, vector<8x128xf32>
    %cst_12 = arith.constant 0.116101414 : f32
    %cst_13 = arith.constant 0.0638981238 : f32
    %34 = vector.broadcast %cst_12 : f32 to vector<8x128xf32>
    %35 = vector.broadcast %cst_13 : f32 to vector<8x128xf32>
    %36 = arith.select %15, %34, %35 : vector<8x128xi1>, vector<8x128xf32>
    %cst_14 = arith.constant 0.238904908 : f32
    %cst_15 = arith.constant 0.18452771 : f32
    %37 = vector.broadcast %cst_14 : f32 to vector<8x128xf32>
    %38 = vector.broadcast %cst_15 : f32 to vector<8x128xf32>
    %39 = arith.select %15, %37, %38 : vector<8x128xi1>, vector<8x128xf32>
    %cst_16 = arith.constant 0.18452771 : f32
    %cst_17 = arith.constant 0.238904953 : f32
    %40 = vector.broadcast %cst_16 : f32 to vector<8x128xf32>
    %41 = vector.broadcast %cst_17 : f32 to vector<8x128xf32>
    %42 = arith.select %15, %40, %41 : vector<8x128xi1>, vector<8x128xf32>
    %cst_18 = arith.constant 0.0638981685 : f32
    %cst_19 = arith.constant 0.116101347 : f32
    %43 = vector.broadcast %cst_18 : f32 to vector<8x128xf32>
    %44 = vector.broadcast %cst_19 : f32 to vector<8x128xf32>
    %45 = arith.select %15, %43, %44 : vector<8x128xi1>, vector<8x128xf32>
    %cst_20 = arith.constant 0.0159872379 : f32
    %cst_21 = arith.constant 0.0325980186 : f32
    %46 = vector.broadcast %cst_20 : f32 to vector<8x128xf32>
    %47 = vector.broadcast %cst_21 : f32 to vector<8x128xf32>
    %48 = arith.select %15, %46, %47 : vector<8x128xi1>, vector<8x128xf32>
    %cst_22 = arith.constant 0.00366330147 : f32
    %cst_23 = arith.constant 0.0076890788 : f32
    %49 = vector.broadcast %cst_22 : f32 to vector<8x128xf32>
    %50 = vector.broadcast %cst_23 : f32 to vector<8x128xf32>
    %51 = arith.select %15, %49, %50 : vector<8x128xi1>, vector<8x128xf32>
    %52 = arith.select %19, %33, %30 : vector<8x128xi1>, vector<8x128xf32>
    %53 = arith.select %19, %39, %36 : vector<8x128xi1>, vector<8x128xf32>
    %54 = arith.select %19, %45, %42 : vector<8x128xi1>, vector<8x128xf32>
    %55 = arith.select %19, %51, %48 : vector<8x128xi1>, vector<8x128xf32>
    %56 = arith.select %23, %53, %52 : vector<8x128xi1>, vector<8x128xf32>
    %57 = arith.select %23, %55, %54 : vector<8x128xi1>, vector<8x128xf32>
    %58 = arith.select %27, %57, %56 : vector<8x128xi1>, vector<8x128xf32>
    %cst_24 = arith.constant 0.0455878451 : f32
    %cst_25 = arith.constant 0.0244526453 : f32
    %59 = vector.broadcast %cst_24 : f32 to vector<8x128xf32>
    %60 = vector.broadcast %cst_25 : f32 to vector<8x128xf32>
    %61 = arith.select %15, %59, %60 : vector<8x128xi1>, vector<8x128xf32>
    %cst_26 = arith.constant 0.145219892 : f32
    %cst_27 = arith.constant 0.0829295069 : f32
    %62 = vector.broadcast %cst_26 : f32 to vector<8x128xf32>
    %63 = vector.broadcast %cst_27 : f32 to vector<8x128xf32>
    %64 = arith.select %15, %62, %63 : vector<8x128xi1>, vector<8x128xf32>
    %cst_28 = arith.constant 0.356577635 : f32
    %cst_29 = arith.constant 0.239120245 : f32
    %65 = vector.broadcast %cst_28 : f32 to vector<8x128xf32>
    %66 = vector.broadcast %cst_29 : f32 to vector<8x128xf32>
    %67 = arith.select %15, %65, %66 : vector<8x128xi1>, vector<8x128xf32>
    %cst_30 = arith.constant 5.000000e-01 : f32
    %cst_31 = arith.constant 0.459217101 : f32
    %68 = vector.broadcast %cst_30 : f32 to vector<8x128xf32>
    %69 = vector.broadcast %cst_31 : f32 to vector<8x128xf32>
    %70 = arith.select %15, %68, %69 : vector<8x128xi1>, vector<8x128xf32>
    %cst_32 = arith.constant 0.540782928 : f32
    %cst_33 = arith.constant 5.000000e-01 : f32
    %71 = vector.broadcast %cst_32 : f32 to vector<8x128xf32>
    %72 = vector.broadcast %cst_33 : f32 to vector<8x128xf32>
    %73 = arith.select %15, %71, %72 : vector<8x128xi1>, vector<8x128xf32>
    %cst_34 = arith.constant 0.760879635 : f32
    %cst_35 = arith.constant 0.643422484 : f32
    %74 = vector.broadcast %cst_34 : f32 to vector<8x128xf32>
    %75 = vector.broadcast %cst_35 : f32 to vector<8x128xf32>
    %76 = arith.select %15, %74, %75 : vector<8x128xi1>, vector<8x128xf32>
    %cst_36 = arith.constant 0.917070508 : f32
    %cst_37 = arith.constant 0.854780077 : f32
    %77 = vector.broadcast %cst_36 : f32 to vector<8x128xf32>
    %78 = vector.broadcast %cst_37 : f32 to vector<8x128xf32>
    %79 = arith.select %15, %77, %78 : vector<8x128xi1>, vector<8x128xf32>
    %cst_38 = arith.constant 0.975547552 : f32
    %cst_39 = arith.constant 0.954412221 : f32
    %80 = vector.broadcast %cst_38 : f32 to vector<8x128xf32>
    %81 = vector.broadcast %cst_39 : f32 to vector<8x128xf32>
    %82 = arith.select %15, %80, %81 : vector<8x128xi1>, vector<8x128xf32>
    %83 = arith.select %19, %64, %61 : vector<8x128xi1>, vector<8x128xf32>
    %84 = arith.select %19, %70, %67 : vector<8x128xi1>, vector<8x128xf32>
    %85 = arith.select %19, %76, %73 : vector<8x128xi1>, vector<8x128xf32>
    %86 = arith.select %19, %82, %79 : vector<8x128xi1>, vector<8x128xf32>
    %87 = arith.select %23, %84, %83 : vector<8x128xi1>, vector<8x128xf32>
    %88 = arith.select %23, %86, %85 : vector<8x128xi1>, vector<8x128xf32>
    %89 = arith.select %27, %88, %87 : vector<8x128xi1>, vector<8x128xf32>
    %90 = arith.mulf %58, %4 : vector<8x128xf32>
    %91 = arith.addf %90, %89 : vector<8x128xf32>
    %c0_40 = arith.constant 0 : index
    %c0_41 = arith.constant 0 : index
    %92 = vector.load %arg2[%c0_40, %c0_41] : memref<8x128xf32, #tpu.memory_space<vmem>>, vector<8x128xf32>
    tpu.vector_store %arg2[%c0_40, %c0_41], %91 {strides = array<i32>} : memref<8x128xf32, #tpu.memory_space<vmem>>, vector<8x128xf32>,
    return
  }
  func.func @transform_0(%arg0: i32) -> (i32, i32) {
    %c0_i32 = arith.constant 0 : i32
    %c0_i32_0 = arith.constant 0 : i32
    return %arg0, %c0_i32 : i32, i32
  }
  func.func @transform_1(%arg0: i32) -> (i32, i32) {
    %c0_i32 = arith.constant 0 : i32
    %c0_i32_0 = arith.constant 0 : i32
    return %arg0, %c0_i32 : i32, i32
  }
}

</mosaic_0001>

<llo_original>
// kernel: self_define_apx.1
$region0: #{self_define_apx.1}
  #allocation0 [shape = 'u32[]', space=smem, size = 0x4, offset = 0x4, fixed_abs, tag = 'smem constant byte address 0x4 - core index']
  #allocation1 [shape = 'u32[144,128]{1,0:T(1,128)}', space=vmem, size = 0x12000, scoped, tag = 'internal scratch']
  %s0 = inlined_call_operand.vmem [shape: f32[16,128], index: 0, kind: input, shape index: {}]
  %s1 = inlined_call_operand.vmem [shape: f32[16,128], index: 1, kind: output, shape index: {}]
  %s2 = sld [smem:[#allocation0]]
  $region37: #{self_define_apx.1} parent=0
    _
  %s4 = ssub.s32 1, %s2
  %s5 = scalar_select 0, %s4, %s2
  loop: start=0, step=1, limit=4
  $region2: #{self_define_apx.1} parent=0 // loop_pre_header
    _
  $region3: #{self_define_apx.1} parent=0 // loop_header
    %s7 = sphi 0, %s11
    %p8 = scmp.ge.s32.totalorder %s7, 4
    %s17 = sphi 0, %s19
    %s20 = sphi 0, %s17
    %s21 = sphi 0, %s20
    %s37 = sphi 0, %s21
    %s43 = sphi 0, %s45
    %s46 = sphi 0, %s43
    %s47 = sphi 0, %s46
    %s63 = sphi 0, %s47
  $region4: #{self_define_apx.1} parent=0 // loop_header_branch
    %10 = sbr.rel (%p8) target = $region8
  $region5: #{self_define_apx.1} parent=0 // loop_body
    %s12 = ssub.s32 %s7, 1
    %s13 = ssub.s32 %s7, 2
    %s14 = sadd.s32 %s7, 1
    %s15 = ssub.s32 %s7, %s14
    %p16 = scmp.eq.s32.totalorder %s15, 0
    %s18 = sadd.s32 %s17, 1
    %s19 = scalar_select %p16, %s17, %s18
    %p22 = pneg %p16
    %p23 = scmp.eq.s32.totalorder %s7, 1
    %p24 = por %p22, %p23
    %p25 = scmp.ne.s32.totalorder %s17, %s20
    %p26 = scmp.eq.s32.totalorder %s7, 0
    %p27 = por %p25, %p26
    %p28 = scmp.ne.s32.totalorder %s17, %s20
    %p29 = scmp.eq.s32.totalorder %s12, 1
    %p30 = por %p28, %p29
    %p31 = scmp.ne.s32.totalorder %s20, %s21
    %p32 = scmp.eq.s32.totalorder %s12, 0
    %p33 = por %p31, %p32
    %p34 = scmp.ne.s32.totalorder %s20, %s21
    %p35 = scmp.eq.s32.totalorder %s13, 1
    %p36 = por %p34, %p35
    %p38 = scmp.ne.s32.totalorder %s21, %s37
    %p39 = scmp.eq.s32.totalorder %s13, 0
    %p40 = por %p38, %p39
    %s41 = ssub.s32 %s7, %s14
    %p42 = scmp.eq.s32.totalorder %s41, 0
    %s44 = sadd.s32 %s43, 1
    %s45 = scalar_select %p42, %s43, %s44
    %p48 = pneg %p42
    %p49 = scmp.eq.s32.totalorder %s7, 1
    %p50 = por %p48, %p49
    %p51 = scmp.ne.s32.totalorder %s43, %s46
    %p52 = scmp.eq.s32.totalorder %s7, 0
    %p53 = por %p51, %p52
    %p54 = scmp.ne.s32.totalorder %s43, %s46
    %p55 = scmp.eq.s32.totalorder %s12, 1
    %p56 = por %p54, %p55
    %p57 = scmp.ne.s32.totalorder %s46, %s47
    %p58 = scmp.eq.s32.totalorder %s12, 0
    %p59 = por %p57, %p58
    %p60 = scmp.ne.s32.totalorder %s46, %s47
    %p61 = scmp.eq.s32.totalorder %s13, 1
    %p62 = por %p60, %p61
    %p64 = scmp.ne.s32.totalorder %s47, %s63
    %p65 = scmp.eq.s32.totalorder %s13, 0
    %p66 = por %p64, %p65
    %p67 = scmp.le.s32.totalorder 1, %s7
    %p68 = scmp.lt.s32.totalorder %s7, 3
    %p69 = pnand %p67, %p68
    %p70 = pneg %p69
    // Predicated region
    $region9: #{self_define_apx.1} parent=5 // pred_check
      _
    $region10: #{self_define_apx.1} parent=5 // pred_check_branch
      %72 = sbr.rel (%p69) target = $region12
    $region11: #{self_define_apx.1} parent=5 // pred_region
      %s73 = ssub.s32 %s7, 1
    $region12: #{self_define_apx.1} parent=5 // pred_fallthru
      _
    %p74 = scmp.lt.s32.totalorder %s7, 2
    // Predicated region
    $region13: #{self_define_apx.1} parent=5 // pred_check
      %p75 = pneg %p74
    $region14: #{self_define_apx.1} parent=5 // pred_check_branch
      %77 = sbr.rel (%p75) target = $region16
    $region15: #{self_define_apx.1} parent=5 // pred_region
      // Predicated region
      $region17: #{self_define_apx.1} parent=15 // pred_check
        %p78 = pneg %p27
      $region18: #{self_define_apx.1} parent=15 // pred_check_branch
        %80 = sbr.rel (%p78) target = $region20
      $region19: #{self_define_apx.1} parent=15 // pred_region
        %p81 = scmp.lt.s32.totalorder %s7, 1
        %s82 = scalar_select %p81, %s7, 1
        %s83 = smul.addr %s82, 8
        %s84 = scalar_lea.vmem %s0, %s83
      $region20: #{self_define_apx.1} parent=15 // pred_fallthru
        _
    $region16: #{self_define_apx.1} parent=5 // pred_fallthru
      _
    %p85 = scmp.le.s32.totalorder 1, %s7
    %p86 = scmp.lt.s32.totalorder %s7, 3
    %p87 = pnand %p85, %p86
    %p88 = pneg %p87
    // Predicated region
    $region21: #{self_define_apx.1} parent=5 // pred_check
      _
    $region22: #{self_define_apx.1} parent=5 // pred_check_branch
      %90 = sbr.rel (%p87) target = $region24
    $region23: #{self_define_apx.1} parent=5 // pred_region
      %s91 = ssub.s32 %s7, 1
      %p92 = scmp.lt.s32.totalorder %s12, 1
      %s93 = scalar_select %p92, %s12, 1
      %s94 = smul.addr %s93, 8
      %s95 = scalar_lea.vmem %s0, %s94
      %p96 = pneg %p33
      %p97 = pneg %p30
      %p98 = pneg %p59
      %p99 = pneg %p56
      %p100 = scmp.lt.s32.totalorder %s12, 1
      %s101 = scalar_select %p100, %s12, 1
      %s102 = smul.addr %s101, 8
      %s103 = scalar_lea.vmem %s1, %s102
      %p104 = scmp.lt.s32.totalorder %s12, 1
      %s105 = scalar_select %p104, %s12, 1
      %s106 = smul.addr %s105, 8
      %s107 = scalar_lea.vmem %s0, %s106
      %p108 = scmp.lt.s32.totalorder %s12, 1
      %s109 = scalar_select %p108, %s12, 1
      %s110 = smul.addr %s109, 8
      %s111 = scalar_lea.vmem %s1, %s110
      %v112 = vld [vmem:[%s107] sm:$0xff]
      %v113 = vmax.f32 %v112, -6.0
      %v114 = vmin.f32 %v113, 6.0
      %v115 = vsub.f32 %v114, -6.0
      %v116 = vmul.f32 %v115, 1.3333334
      %v117 = vmin.f32 %v116, 15.0
      %v118 = vcvt.f32.s32.to.zero.pseudo %v117
      %v119 = vand.u32 %v118, 1
      %vm120 = vcmp.ne.s32.totalorder %v119, 0
      %v121 = vand.u32 %v118, 2
      %vm122 = vcmp.ne.s32.totalorder %v121, 0
      %v123 = vand.u32 %v118, 4
      %vm124 = vcmp.ne.s32.totalorder %v123, 0
      %v125 = vand.u32 %v118, 8
      %vm126 = vcmp.ne.s32.totalorder %v125, 0
      %v127 = vsel %vm120, 0.007689089, 0.0036633369
      %v128 = vsel %vm120, 0.032598004, 0.015987238
      %v129 = vsel %vm120, 0.116101414, 0.063898124
      %v130 = vsel %vm120, 0.23890491, 0.18452771
      %v131 = vsel %vm120, 0.18452771, 0.23890495
      %v132 = vsel %vm120, 0.06389817, 0.11610135
      %v133 = vsel %vm120, 0.015987238, 0.03259802
      %v134 = vsel %vm120, 0.0036633015, 0.007689079
      %v135 = vsel %vm122, %v128, %v127
      %v136 = vsel %vm122, %v130, %v129
      %v137 = vsel %vm122, %v132, %v131
      %v138 = vsel %vm122, %v134, %v133
      %v139 = vsel %vm124, %v136, %v135
      %v140 = vsel %vm124, %v138, %v137
      %v141 = vsel %vm126, %v140, %v139
      %v142 = vsel %vm120, 0.045587845, 0.024452645
      %v143 = vsel %vm120, 0.14521989, 0.08292951
      %v144 = vsel %vm120, 0.35657763, 0.23912024
      %v145 = vsel %vm120, 0.5, 0.4592171
      %v146 = vsel %vm120, 0.5407829, 0.5
      %v147 = vsel %vm120, 0.76087964, 0.6434225
      %v148 = vsel %vm120, 0.9170705, 0.8547801
      %v149 = vsel %vm120, 0.97554755, 0.9544122
      %v150 = vsel %vm122, %v143, %v142
      %v151 = vsel %vm122, %v145, %v144
      %v152 = vsel %vm122, %v147, %v146
      %v153 = vsel %vm122, %v149, %v148
      %v154 = vsel %vm124, %v151, %v150
      %v155 = vsel %vm124, %v153, %v152
      %v156 = vsel %vm126, %v155, %v154
      %v157 = vmul.f32 %v141, %v114
      %v158 = vadd.f32 %v157, %v156
      %159 = vst [vmem:[%s111] sm:$0xff] %v158
      %p160 = scmp.lt.s32.totalorder %s12, 1
      %s161 = scalar_select %p160, %s12, 1
      %s162 = smul.addr %s161, 8
      %s163 = scalar_lea.vmem %s1, %s162
      // Predicated region
      $region25: #{self_define_apx.1} parent=23 // pred_check
        %p164 = pneg %p56
      $region26: #{self_define_apx.1} parent=23 // pred_check_branch
        %166 = sbr.rel (%p164) target = $region28
      $region27: #{self_define_apx.1} parent=23 // pred_region
        _
      $region28: #{self_define_apx.1} parent=23 // pred_fallthru
        _
    $region24: #{self_define_apx.1} parent=5 // pred_fallthru
      _
    %p167 = scmp.le.s32.totalorder 2, %s7
    // Predicated region
    $region29: #{self_define_apx.1} parent=5 // pred_check
      %p168 = pneg %p167
    $region30: #{self_define_apx.1} parent=5 // pred_check_branch
      %170 = sbr.rel (%p168) target = $region32
    $region31: #{self_define_apx.1} parent=5 // pred_region
      %s171 = ssub.s32 %s7, 2
      // Predicated region
      $region33: #{self_define_apx.1} parent=31 // pred_check
        %p172 = pneg %p62
      $region34: #{self_define_apx.1} parent=31 // pred_check_branch
        %174 = sbr.rel (%p172) target = $region36
      $region35: #{self_define_apx.1} parent=31 // pred_region
        %p175 = scmp.lt.s32.totalorder %s13, 1
        %s176 = scalar_select %p175, %s13, 1
        %s177 = smul.addr %s176, 8
        %s178 = scalar_lea.vmem %s1, %s177
      $region36: #{self_define_apx.1} parent=31 // pred_fallthru
        _
    $region32: #{self_define_apx.1} parent=5 // pred_fallthru
      _
  $region6: #{self_define_apx.1} parent=0 // loop_footer
    %s11 = sadd.s32 1, %s7
  $region7: #{self_define_apx.1} parent=0 // loop_footer_branch
    %6 = sbr.rel target = $region3
  $region8: #{self_define_apx.1} parent=0 // loop_exit
    _

</llo_original>
